<compile_context>
chip_gen: v7x
topology: tpu7x:2x2x1
jax: 0.10.0
libtpu: 0.0.40
codegen_flags: <defaults>
</compile_context>

<pallas_src>
import functools
import math

import jax
import jax.numpy as jnp
from jax import lax
from jax.experimental import pallas as pl
from jax.experimental.pallas import tpu as pltpu

_MiB = 1024 * 1024


# ---------------------------------------------------------------------------
# Best-effort hardware queries (conservative fallbacks if unavailable).
# ---------------------------------------------------------------------------

def _tpu_vmem_bytes():
    try:
        v = int(pltpu.get_tpu_info().vmem_capacity_bytes)
        if v > 0:
            return v
    except Exception:
        pass
    return 64 * _MiB  # smallest per-TC VMEM across v5e / v6e / v7x


def _tpu_num_tensorcores():
    try:
        info = pltpu.get_tpu_info()
        for attr in ("num_cores", "num_tensorcores", "tensorcore_count", "core_count"):
            v = getattr(info, attr, None)
            if v:
                return max(1, int(v))
    except Exception:
        pass
    try:
        return max(1, int(getattr(jax.devices()[0], "num_cores", 1)))
    except Exception:
        return 1


def _plan_blocks(num_planes, in_plane_elems, out_plane_elems, itemsize,
                 target_block_bytes=None):
    """Pick planes-per-block, grid steps and a VMEM limit for a plane-parallel
    elementwise kernel over (num_planes, H, W) data."""
    vmem_cap = _tpu_vmem_bytes()
    num_cores = _tpu_num_tensorcores()
    if target_block_bytes is None:
        # ~16 MiB steps on 128 MiB-VMEM parts (v5e/v6e), ~8 MiB on v7x (64 MiB).
        target_block_bytes = max(4 * _MiB, min(16 * _MiB, vmem_cap // 8))
    bytes_per_plane = max(1, (in_plane_elems + out_plane_elems) * itemsize)
    per = max(1, min(num_planes, target_block_bytes // bytes_per_plane))
    if num_cores > 1:
        # Give every TensorCore at least one grid step (v7x megacore sharding);
        # on single-TC parts keep one big block (small-tensor fast path).
        per = min(per, -(-num_planes // num_cores))
    steps = -(-num_planes // per)  # ceil-div: ragged last block is fine
    block_bytes = per * bytes_per_plane
    # Headroom for double-buffered in+out blocks, capped below physical VMEM.
    vmem_limit = int(min(max(vmem_cap * 3 // 4, 32 * _MiB),
                         max(4 * block_bytes, 32 * _MiB)))
    return per, steps, vmem_limit


# ---------------------------------------------------------------------------
# CustomPad: zero constant padding on the last two dims of an NCHW tensor.
# ---------------------------------------------------------------------------

def _pad_compose_kernel(x_ref, o_ref, *, pad_top, pad_bottom, pad_left, pad_right):
    """Compose the zero-padded tile in registers; one full-tile store."""
    x = x_ref[...]
    P, H, W = x.shape
    dt = o_ref.dtype
    W_out = W + pad_left + pad_right
    x = x.astype(dt)
    if pad_left or pad_right:
        parts = []
        if pad_left:
            parts.append(jnp.zeros((P, H, pad_left), dt))
        parts.append(x)
        if pad_right:
            parts.append(jnp.zeros((P, H, pad_right), dt))
        x = jnp.concatenate(parts, axis=2)
    if pad_top or pad_bottom:
        parts = []
        if pad_top:
            parts.append(jnp.zeros((P, pad_top, W_out), dt))
        parts.append(x)
        if pad_bottom:
            parts.append(jnp.zeros((P, pad_bottom, W_out), dt))
        x = jnp.concatenate(parts, axis=1)
    o_ref[...] = x


def custom_pad(x, padding, *, target_block_bytes=None):
    """Equivalent of torch.nn.functional.pad(x, padding) (constant, value=0)
    for a 4D NCHW tensor and padding = (left, right, top, bottom)."""
    assert x.ndim == 4, "expecting NCHW input"
    assert len(padding) == 4, "expecting (left, right, top, bottom) padding"
    p_left, p_right, p_top, p_bottom = (int(p) for p in padding)
    # TODO(synk): torch F.pad also allows negative (crop) padding; unsupported here.
    assert min(p_left, p_right, p_top, p_bottom) >= 0, "negative padding unsupported"
    if p_left == p_right == p_top == p_bottom == 0:
        return x

    N, C, H, W = x.shape
    H_out, W_out = H + p_top + p_bottom, W + p_left + p_right
    num_planes = N * C
    itemsize = jnp.dtype(x.dtype).itemsize
    per, steps, vmem_limit = _plan_blocks(
        num_planes, H * W, H_out * W_out, itemsize, target_block_bytes)

    x2 = x.reshape(num_planes, H, W)  # metadata-only (contiguous NCHW)
    kernel = functools.partial(
        _pad_compose_kernel,
        pad_top=p_top, pad_bottom=p_bottom, pad_left=p_left, pad_right=p_right)

    out2 = pl.pallas_call(
        kernel,
        out_shape=jax.ShapeDtypeStruct((num_planes, H_out, W_out), x.dtype),
        grid=(steps,),
        in_specs=[pl.BlockSpec((per, H, W), lambda i: (i, 0, 0))],
        out_specs=pl.BlockSpec((per, H_out, W_out), lambda i: (i, 0, 0)),
        compiler_params=pltpu.CompilerParams(
            dimension_semantics=("parallel",),
            vmem_limit_bytes=vmem_limit),
        cost_estimate=pl.CostEstimate(
            flops=0, transcendentals=0,
            bytes_accessed=int(num_planes * (H * W + H_out * W_out) * itemsize)),
    )(x2)
    return out2.reshape(N, C, H_out, W_out)


# ---------------------------------------------------------------------------
# Fused CustomPad((0,1,0,1)) + MaxPool2d(kernel_size=2, stride=1).
# out[i,j] = max(p[i,j], p[i,j+1], p[i+1,j], p[i+1,j+1]) with p zero-padded
# by one on the right/bottom, so the output has the same H, W as the input.
# ---------------------------------------------------------------------------

def _pad_maxpool_kernel(x_ref, o_ref):
    x = x_ref[...]
    P, H, W = x.shape
    dt = x.dtype
    # Shift left by one along W, zero column = the right zero pad.
    x_r = jnp.concatenate([x[:, :, 1:], jnp.zeros((P, H, 1), dt)], axis=2)
    row_max = jnp.maximum(x, x_r)
    # Shift up by one along H, zero row = the bottom zero pad.
    row_max_dn = jnp.concatenate(
        [row_max[:, 1:, :], jnp.zeros((P, 1, W), dt)], axis=1)
    o_ref[...] = jnp.maximum(row_max, row_max_dn)


def pad_maxpool_2x2_s1(x, *, target_block_bytes=None):
    """CustomPad((0,1,0,1)) followed by MaxPool2d(2, stride=1), fused so the
    padded activation never round-trips through HBM."""
    assert x.ndim == 4, "expecting NCHW input"
    N, C, H, W = x.shape
    num_planes = N * C
    itemsize = jnp.dtype(x.dtype).itemsize
    per, steps, vmem_limit = _plan_blocks(
        num_planes, H * W, H * W, itemsize, target_block_bytes)

    x2 = x.reshape(num_planes, H, W)
    out2 = pl.pallas_call(
        _pad_maxpool_kernel,
        out_shape=jax.ShapeDtypeStruct((num_planes, H, W), x.dtype),
        grid=(steps,),
        in_specs=[pl.BlockSpec((per, H, W), lambda i: (i, 0, 0))],
        out_specs=pl.BlockSpec((per, H, W), lambda i: (i, 0, 0)),
        compiler_params=pltpu.CompilerParams(
            dimension_semantics=("parallel",),
            vmem_limit_bytes=vmem_limit),
        cost_estimate=pl.CostEstimate(
            flops=int(3 * num_planes * H * W), transcendentals=0,
            bytes_accessed=int(2 * num_planes * H * W * itemsize)),
    )(x2)
    return out2.reshape(N, C, H, W)


# ---------------------------------------------------------------------------
# Full DRPDetNet forward (pad / pad+maxpool are Pallas; conv / ReLU are XLA).
# ---------------------------------------------------------------------------

def _conv2d(x, w, b, padding):
    # TODO(synk): Conv2d layers stay as lax.conv_general_dilated (XLA), not
    # hand-written Pallas kernels; only the pad (+ fused pad+maxpool) is Pallas.
    out = lax.conv_general_dilated(
        x, w, window_strides=(1, 1),
        padding=((padding[0], padding[0]), (padding[1], padding[1])),
        dimension_numbers=("NCHW", "OIHW", "NCHW"))
    return out + b.reshape(1, -1, 1, 1)


def init_drpdetnet_params(key):
    def conv_init(k, out_c, in_c, kh, kw):
        k1, k2 = jax.random.split(k)
        bound = 1.0 / math.sqrt(in_c * kh * kw)
        w = jax.random.uniform(k1, (out_c, in_c, kh, kw), jnp.float32, -bound, bound)
        b = jax.random.uniform(k2, (out_c,), jnp.float32, -bound, bound)
        return w, b

    keys = jax.random.split(key, 5)
    return {
        "conv1": conv_init(keys[0], 32, 1, 9, 9),
        "conv2": conv_init(keys[1], 32, 32, 3, 3),
        "conv3": conv_init(keys[2], 32, 32, 1, 7),
        "conv4": conv_init(keys[3], 32, 32, 7, 1),
        "conv5": conv_init(keys[4], 1, 32, 3, 3),
    }


def drp_det_net_forward(params, x):
    x = jax.nn.relu(_conv2d(x, *params["conv1"], padding=(4, 4)))
    x = jax.nn.relu(_conv2d(x, *params["conv2"], padding=(1, 1)))
    x = jax.nn.relu(_conv2d(x, *params["conv3"], padding=(0, 3)))
    x = jax.nn.relu(_conv2d(x, *params["conv4"], padding=(3, 0)))
    # CustomPad((0,1,0,1)) + MaxPool2d(2, stride=1), fused into one Pallas
    # kernel (saves a full HBM round trip of the padded activation).
    x = pad_maxpool_2x2_s1(x)
    x = _conv2d(x, *params["conv5"], padding=(1, 1))
    return x


if __name__ == "__main__":
    key = jax.random.PRNGKey(0)
    k_act, k_x, k_params = jax.random.split(key, 3)

    # 1) Standalone Pallas CustomPad checks at the shape it sees in DRPDetNet
    #    (32-channel activation); padding order is torch's (left,right,top,bottom).
    act = jax.random.normal(k_act, (2, 32, 16, 16), dtype=jnp.float32)
    for pad_cfg in [(0, 1, 0, 1), (2, 3, 1, 4)]:
        got = jax.block_until_ready(custom_pad(act, pad_cfg))
        ref = jnp.pad(act, ((0, 0), (0, 0),
                            (pad_cfg[2], pad_cfg[3]), (pad_cfg[0], pad_cfg[1])))
        assert got.shape == ref.shape, (got.shape, ref.shape)
        assert jnp.array_equal(got, ref), f"pad mismatch for {pad_cfg}"

    # 2) Fused pad + maxpool kernel vs. unfused reference.
    fused = jax.block_until_ready(pad_maxpool_2x2_s1(act))
    ref_p = jnp.pad(act, ((0, 0), (0, 0), (0, 1), (0, 1)))
    ref_mp = lax.reduce_window(ref_p, -float("inf"), lax.max,
                               window_dimensions=(1, 1, 2, 2),
                               window_strides=(1, 1, 1, 1),
                               padding="VALID")
    assert fused.shape == ref_mp.shape, (fused.shape, ref_mp.shape)
    assert jnp.array_equal(fused, ref_mp), "fused pad+maxpool mismatch"

    # 3) Full DRPDetNet forward (in_channels=1 per the module).
    params = init_drpdetnet_params(k_params)
    x = jax.random.normal(k_x, (2, 1, 16, 16), dtype=jnp.float32)
    y = jax.block_until_ready(jax.jit(drp_det_net_forward)(params, x))
    assert y.shape == (2, 1, 16, 16), y.shape
    assert bool(jnp.all(jnp.isfinite(y)))

    print("KERNEL_OK")
</pallas_src>

<mosaic_0001>
module attributes {stable_mosaic.version = 11 : i64} {
  func.func @_pad_compose_kernel(%arg0: i32, %arg1: memref<64x16x16xf32, #tpu.memory_space<vmem>>, %arg2: memref<64x17x17xf32, #tpu.memory_space<vmem>>) attributes {dimension_semantics = [#tpu.dimension_semantics<parallel>], iteration_bounds = array<i64: 1>, scalar_prefetch = 0 : i64, scratch_operands = 0 : i64, tpu.core_type = #tpu.core_type<tc>, window_params = [{transform_indices = @transform_0, window_bounds = array<i64: 64, 16, 16>}, {transform_indices = @transform_1, window_bounds = array<i64: 64, 17, 17>}]} {
    %c0 = arith.constant 0 : index
    %c0_0 = arith.constant 0 : index
    %c0_1 = arith.constant 0 : index
    %0 = vector.load %arg1[%c0, %c0_0, %c0_1] : memref<64x16x16xf32, #tpu.memory_space<vmem>>, vector<64x16x16xf32>
    %cst = arith.constant 0.000000e+00 : f32
    %1 = vector.broadcast %cst : f32 to vector<64x16x1xf32>
    %2 = tpu.concatenate %0, %1 in 2 : vector<64x16x16xf32>, vector<64x16x1xf32> -> vector<64x16x17xf32>
    %cst_2 = arith.constant 0.000000e+00 : f32
    %3 = vector.broadcast %cst_2 : f32 to vector<64x1x17xf32>
    %4 = tpu.concatenate %2, %3 in 1 : vector<64x16x17xf32>, vector<64x1x17xf32> -> vector<64x17x17xf32>
    %c0_3 = arith.constant 0 : index
    %c0_4 = arith.constant 0 : index
    %c0_5 = arith.constant 0 : index
    %5 = vector.load %arg2[%c0_3, %c0_4, %c0_5] : memref<64x17x17xf32, #tpu.memory_space<vmem>>, vector<64x17x17xf32>
    tpu.vector_store %arg2[%c0_3, %c0_4, %c0_5], %4 {strides = array<i32>} : memref<64x17x17xf32, #tpu.memory_space<vmem>>, vector<64x17x17xf32>,
    return
  }
  func.func @transform_0(%arg0: i32) -> (i32, i32, i32) {
    %c0_i32 = arith.constant 0 : i32
    %c0_i32_0 = arith.constant 0 : i32
    %c0_i32_1 = arith.constant 0 : i32
    return %arg0, %c0_i32, %c0_i32_0 : i32, i32, i32
  }
  func.func @transform_1(%arg0: i32) -> (i32, i32, i32) {
    %c0_i32 = arith.constant 0 : i32
    %c0_i32_0 = arith.constant 0 : i32
    %c0_i32_1 = arith.constant 0 : i32
    return %arg0, %c0_i32, %c0_i32_0 : i32, i32, i32
  }
}

</mosaic_0001>

<llo_original>
// kernel: tpu_custom_call.1
$region0: #{tpu_custom_call.1}
  #allocation0 [shape = 'u32[]', space=smem, size = 0x4, offset = 0x4, fixed_abs, tag = 'smem constant byte address 0x4 - core index']
  #allocation1 [shape = 'u32[144,128]{1,0:T(1,128)}', space=vmem, size = 0x12000, scoped, tag = 'internal scratch']
  %s0 = inlined_call_operand.vmem [shape: f32[64,16,16], index: 0, kind: input, shape index: {}]
  %s1 = inlined_call_operand.vmem [shape: f32[64,17,17], index: 1, kind: output, shape index: {}]
  %s2 = sld [smem:[#allocation0]]
  $region14: #{tpu_custom_call.1} parent=0
    _
  %s4 = ssub.s32 1, %s2
  %s5 = scalar_select 0, %s4, %s2
  // Predicated region
  $region2: #{tpu_custom_call.1} parent=0 // pred_check
    _
  $region3: #{tpu_custom_call.1} parent=0 // pred_check_branch
    %7 = sbr.rel (0) target = $region5
  $region4: #{tpu_custom_call.1} parent=0 // pred_region
    _
  $region5: #{tpu_custom_call.1} parent=0 // pred_fallthru
    _
  %v8 = vld [vmem:[%s0] sm:$0xff]
  %v9 = vld [vmem:[%s0 + $0x8] sm:$0xff]
  %v10 = vld [vmem:[%s0 + $0x10] sm:$0xff]
  %v11 = vld [vmem:[%s0 + $0x18] sm:$0xff]
  %v12 = vld [vmem:[%s0 + $0x20] sm:$0xff]
  %v13 = vld [vmem:[%s0 + $0x28] sm:$0xff]
  %v14 = vld [vmem:[%s0 + $0x30] sm:$0xff]
  %v15 = vld [vmem:[%s0 + $0x38] sm:$0xff]
  %v16 = vld [vmem:[%s0 + $0x40] sm:$0xff]
  %v17 = vld [vmem:[%s0 + $0x48] sm:$0xff]
  %v18 = vld [vmem:[%s0 + $0x50] sm:$0xff]
  %v19 = vld [vmem:[%s0 + $0x58] sm:$0xff]
  %v20 = vld [vmem:[%s0 + $0x60] sm:$0xff]
  %v21 = vld [vmem:[%s0 + $0x68] sm:$0xff]
  %v22 = vld [vmem:[%s0 + $0x70] sm:$0xff]
  %v23 = vld [vmem:[%s0 + $0x78] sm:$0xff]
  %v24 = vld [vmem:[%s0 + $0x80] sm:$0xff]
  %v25 = vld [vmem:[%s0 + $0x88] sm:$0xff]
  %v26 = vld [vmem:[%s0 + $0x90] sm:$0xff]
  %v27 = vld [vmem:[%s0 + $0x98] sm:$0xff]
  %v28 = vld [vmem:[%s0 + $0xa0] sm:$0xff]
  %v29 = vld [vmem:[%s0 + $0xa8] sm:$0xff]
  %v30 = vld [vmem:[%s0 + $0xb0] sm:$0xff]
  %v31 = vld [vmem:[%s0 + $0xb8] sm:$0xff]
  %v32 = vld [vmem:[%s0 + $0xc0] sm:$0xff]
  %v33 = vld [vmem:[%s0 + $0xc8] sm:$0xff]
  %v34 = vld [vmem:[%s0 + $0xd0] sm:$0xff]
  %v35 = vld [vmem:[%s0 + $0xd8] sm:$0xff]
  %v36 = vld [vmem:[%s0 + $0xe0] sm:$0xff]
  %v37 = vld [vmem:[%s0 + $0xe8] sm:$0xff]
  %v38 = vld [vmem:[%s0 + $0xf0] sm:$0xff]
  %v39 = vld [vmem:[%s0 + $0xf8] sm:$0xff]
  %v40 = vld [vmem:[%s0 + $0x100] sm:$0xff]
  %v41 = vld [vmem:[%s0 + $0x108] sm:$0xff]
  %v42 = vld [vmem:[%s0 + $0x110] sm:$0xff]
  %v43 = vld [vmem:[%s0 + $0x118] sm:$0xff]
  %v44 = vld [vmem:[%s0 + $0x120] sm:$0xff]
  %v45 = vld [vmem:[%s0 + $0x128] sm:$0xff]
  %v46 = vld [vmem:[%s0 + $0x130] sm:$0xff]
  %v47 = vld [vmem:[%s0 + $0x138] sm:$0xff]
  %v48 = vld [vmem:[%s0 + $0x140] sm:$0xff]
  %v49 = vld [vmem:[%s0 + $0x148] sm:$0xff]
  %v50 = vld [vmem:[%s0 + $0x150] sm:$0xff]
  %v51 = vld [vmem:[%s0 + $0x158] sm:$0xff]
  %v52 = vld [vmem:[%s0 + $0x160] sm:$0xff]
  %v53 = vld [vmem:[%s0 + $0x168] sm:$0xff]
  %v54 = vld [vmem:[%s0 + $0x170] sm:$0xff]
  %v55 = vld [vmem:[%s0 + $0x178] sm:$0xff]
  %v56 = vld [vmem:[%s0 + $0x180] sm:$0xff]
  %v57 = vld [vmem:[%s0 + $0x188] sm:$0xff]
  %v58 = vld [vmem:[%s0 + $0x190] sm:$0xff]
  %v59 = vld [vmem:[%s0 + $0x198] sm:$0xff]
  %v60 = vld [vmem:[%s0 + $0x1a0] sm:$0xff]
  %v61 = vld [vmem:[%s0 + $0x1a8] sm:$0xff]
  %v62 = vld [vmem:[%s0 + $0x1b0] sm:$0xff]
  %v63 = vld [vmem:[%s0 + $0x1b8] sm:$0xff]
  %v64 = vld [vmem:[%s0 + $0x1c0] sm:$0xff]
  %v65 = vld [vmem:[%s0 + $0x1c8] sm:$0xff]
  %v66 = vld [vmem:[%s0 + $0x1d0] sm:$0xff]
  %v67 = vld [vmem:[%s0 + $0x1d8] sm:$0xff]
  %v68 = vld [vmem:[%s0 + $0x1e0] sm:$0xff]
  %v69 = vld [vmem:[%s0 + $0x1e8] sm:$0xff]
  %v70 = vld [vmem:[%s0 + $0x1f0] sm:$0xff]
  %v71 = vld [vmem:[%s0 + $0x1f8] sm:$0xff]
  %v72 = vld [vmem:[%s0 + $0x200] sm:$0xff]
  %v73 = vld [vmem:[%s0 + $0x208] sm:$0xff]
  %v74 = vld [vmem:[%s0 + $0x210] sm:$0xff]
  %v75 = vld [vmem:[%s0 + $0x218] sm:$0xff]
  %v76 = vld [vmem:[%s0 + $0x220] sm:$0xff]
  %v77 = vld [vmem:[%s0 + $0x228] sm:$0xff]
  %v78 = vld [vmem:[%s0 + $0x230] sm:$0xff]
  %v79 = vld [vmem:[%s0 + $0x238] sm:$0xff]
  %v80 = vld [vmem:[%s0 + $0x240] sm:$0xff]
  %v81 = vld [vmem:[%s0 + $0x248] sm:$0xff]
  %v82 = vld [vmem:[%s0 + $0x250] sm:$0xff]
  %v83 = vld [vmem:[%s0 + $0x258] sm:$0xff]
  %v84 = vld [vmem:[%s0 + $0x260] sm:$0xff]
  %v85 = vld [vmem:[%s0 + $0x268] sm:$0xff]
  %v86 = vld [vmem:[%s0 + $0x270] sm:$0xff]
  %v87 = vld [vmem:[%s0 + $0x278] sm:$0xff]
  %v88 = vld [vmem:[%s0 + $0x280] sm:$0xff]
  %v89 = vld [vmem:[%s0 + $0x288] sm:$0xff]
  %v90 = vld [vmem:[%s0 + $0x290] sm:$0xff]
  %v91 = vld [vmem:[%s0 + $0x298] sm:$0xff]
  %v92 = vld [vmem:[%s0 + $0x2a0] sm:$0xff]
  %v93 = vld [vmem:[%s0 + $0x2a8] sm:$0xff]
  %v94 = vld [vmem:[%s0 + $0x2b0] sm:$0xff]
  %v95 = vld [vmem:[%s0 + $0x2b8] sm:$0xff]
  %v96 = vld [vmem:[%s0 + $0x2c0] sm:$0xff]
  %v97 = vld [vmem:[%s0 + $0x2c8] sm:$0xff]
  %v98 = vld [vmem:[%s0 + $0x2d0] sm:$0xff]
  %v99 = vld [vmem:[%s0 + $0x2d8] sm:$0xff]
  %v100 = vld [vmem:[%s0 + $0x2e0] sm:$0xff]
  %v101 = vld [vmem:[%s0 + $0x2e8] sm:$0xff]
  %v102 = vld [vmem:[%s0 + $0x2f0] sm:$0xff]
  %v103 = vld [vmem:[%s0 + $0x2f8] sm:$0xff]
  %v104 = vld [vmem:[%s0 + $0x300] sm:$0xff]
  %v105 = vld [vmem:[%s0 + $0x308] sm:$0xff]
  %v106 = vld [vmem:[%s0 + $0x310] sm:$0xff]
  %v107 = vld [vmem:[%s0 + $0x318] sm:$0xff]
  %v108 = vld [vmem:[%s0 + $0x320] sm:$0xff]
  %v109 = vld [vmem:[%s0 + $0x328] sm:$0xff]
  %v110 = vld [vmem:[%s0 + $0x330] sm:$0xff]
  %v111 = vld [vmem:[%s0 + $0x338] sm:$0xff]
  %v112 = vld [vmem:[%s0 + $0x340] sm:$0xff]
  %v113 = vld [vmem:[%s0 + $0x348] sm:$0xff]
  %v114 = vld [vmem:[%s0 + $0x350] sm:$0xff]
  %v115 = vld [vmem:[%s0 + $0x358] sm:$0xff]
  %v116 = vld [vmem:[%s0 + $0x360] sm:$0xff]
  %v117 = vld [vmem:[%s0 + $0x368] sm:$0xff]
  %v118 = vld [vmem:[%s0 + $0x370] sm:$0xff]
  %v119 = vld [vmem:[%s0 + $0x378] sm:$0xff]
  %v120 = vld [vmem:[%s0 + $0x380] sm:$0xff]
  %v121 = vld [vmem:[%s0 + $0x388] sm:$0xff]
  %v122 = vld [vmem:[%s0 + $0x390] sm:$0xff]
  %v123 = vld [vmem:[%s0 + $0x398] sm:$0xff]
  %v124 = vld [vmem:[%s0 + $0x3a0] sm:$0xff]
  %v125 = vld [vmem:[%s0 + $0x3a8] sm:$0xff]
  %v126 = vld [vmem:[%s0 + $0x3b0] sm:$0xff]
  %v127 = vld [vmem:[%s0 + $0x3b8] sm:$0xff]
  %v128 = vld [vmem:[%s0 + $0x3c0] sm:$0xff]
  %v129 = vld [vmem:[%s0 + $0x3c8] sm:$0xff]
  %v130 = vld [vmem:[%s0 + $0x3d0] sm:$0xff]
  %v131 = vld [vmem:[%s0 + $0x3d8] sm:$0xff]
  %v132 = vld [vmem:[%s0 + $0x3e0] sm:$0xff]
  %v133 = vld [vmem:[%s0 + $0x3e8] sm:$0xff]
  %v134 = vld [vmem:[%s0 + $0x3f0] sm:$0xff]
  %v135 = vld [vmem:[%s0 + $0x3f8] sm:$0xff]
  %vm136 = vcmask 130048
  %v137 = vsel %vm136, %v8, 0.0
  %v138 = vsel %vm136, %v9, 0.0
  %v139 = vsel %vm136, %v10, 0.0
  %v140 = vsel %vm136, %v11, 0.0
  %v141 = vsel %vm136, %v12, 0.0
  %v142 = vsel %vm136, %v13, 0.0
  %v143 = vsel %vm136, %v14, 0.0
  %v144 = vsel %vm136, %v15, 0.0
  %v145 = vsel %vm136, %v16, 0.0
  %v146 = vsel %vm136, %v17, 0.0
  %v147 = vsel %vm136, %v18, 0.0
  %v148 = vsel %vm136, %v19, 0.0
  %v149 = vsel %vm136, %v20, 0.0
  %v150 = vsel %vm136, %v21, 0.0
  %v151 = vsel %vm136, %v22, 0.0
  %v152 = vsel %vm136, %v23, 0.0
  %v153 = vsel %vm136, %v24, 0.0
  %v154 = vsel %vm136, %v25, 0.0
  %v155 = vsel %vm136, %v26, 0.0
  %v156 = vsel %vm136, %v27, 0.0
  %v157 = vsel %vm136, %v28, 0.0
  %v158 = vsel %vm136, %v29, 0.0
  %v159 = vsel %vm136, %v30, 0.0
  %v160 = vsel %vm136, %v31, 0.0
  %v161 = vsel %vm136, %v32, 0.0
  %v162 = vsel %vm136, %v33, 0.0
  %v163 = vsel %vm136, %v34, 0.0
  %v164 = vsel %vm136, %v35, 0.0
  %v165 = vsel %vm136, %v36, 0.0
  %v166 = vsel %vm136, %v37, 0.0
  %v167 = vsel %vm136, %v38, 0.0
  %v168 = vsel %vm136, %v39, 0.0
  %v169 = vsel %vm136, %v40, 0.0
  %v170 = vsel %vm136, %v41, 0.0
  %v171 = vsel %vm136, %v42, 0.0
  %v172 = vsel %vm136, %v43, 0.0
  %v173 = vsel %vm136, %v44, 0.0
  %v174 = vsel %vm136, %v45, 0.0
  %v175 = vsel %vm136, %v46, 0.0
  %v176 = vsel %vm136, %v47, 0.0
  %v177 = vsel %vm136, %v48, 0.0
  %v178 = vsel %vm136, %v49, 0.0
  %v179 = vsel %vm136, %v50, 0.0
  %v180 = vsel %vm136, %v51, 0.0
  %v181 = vsel %vm136, %v52, 0.0
  %v182 = vsel %vm136, %v53, 0.0
  %v183 = vsel %vm136, %v54, 0.0
  %v184 = vsel %vm136, %v55, 0.0
  %v185 = vsel %vm136, %v56, 0.0
  %v186 = vsel %vm136, %v57, 0.0
  %v187 = vsel %vm136, %v58, 0.0
  %v188 = vsel %vm136, %v59, 0.0
  %v189 = vsel %vm136, %v60, 0.0
  %v190 = vsel %vm136, %v61, 0.0
  %v191 = vsel %vm136, %v62, 0.0
  %v192 = vsel %vm136, %v63, 0.0
  %v193 = vsel %vm136, %v64, 0.0
  %v194 = vsel %vm136, %v65, 0.0
  %v195 = vsel %vm136, %v66, 0.0
  %v196 = vsel %vm136, %v67, 0.0
  %v197 = vsel %vm136, %v68, 0.0
  %v198 = vsel %vm136, %v69, 0.0
  %v199 = vsel %vm136, %v70, 0.0
  %v200 = vsel %vm136, %v71, 0.0
  %v201 = vsel %vm136, %v72, 0.0
  %v202 = vsel %vm136, %v73, 0.0
  %v203 = vsel %vm136, %v74, 0.0
  %v204 = vsel %vm136, %v75, 0.0
  %v205 = vsel %vm136, %v76, 0.0
  %v206 = vsel %vm136, %v77, 0.0
  %v207 = vsel %vm136, %v78, 0.0
  %v208 = vsel %vm136, %v79, 0.0
  %v209 = vsel %vm136, %v80, 0.0
  %v210 = vsel %vm136, %v81, 0.0
  %v211 = vsel %vm136, %v82, 0.0
  %v212 = vsel %vm136, %v83, 0.0
  %v213 = vsel %vm136, %v84, 0.0
  %v214 = vsel %vm136, %v85, 0.0
  %v215 = vsel %vm136, %v86, 0.0
  %v216 = vsel %vm136, %v87, 0.0
  %v217 = vsel %vm136, %v88, 0.0
  %v218 = vsel %vm136, %v89, 0.0
  %v219 = vsel %vm136, %v90, 0.0
  %v220 = vsel %vm136, %v91, 0.0
  %v221 = vsel %vm136, %v92, 0.0
  %v222 = vsel %vm136, %v93, 0.0
  %v223 = vsel %vm136, %v94, 0.0
  %v224 = vsel %vm136, %v95, 0.0
  %v225 = vsel %vm136, %v96, 0.0
  %v226 = vsel %vm136, %v97, 0.0
  %v227 = vsel %vm136, %v98, 0.0
  %v228 = vsel %vm136, %v99, 0.0
  %v229 = vsel %vm136, %v100, 0.0
  %v230 = vsel %vm136, %v101, 0.0
  %v231 = vsel %vm136, %v102, 0.0
  %v232 = vsel %vm136, %v103, 0.0
  %v233 = vsel %vm136, %v104, 0.0
  %v234 = vsel %vm136, %v105, 0.0
  %v235 = vsel %vm136, %v106, 0.0
  %v236 = vsel %vm136, %v107, 0.0
  %v237 = vsel %vm136, %v108, 0.0
  %v238 = vsel %vm136, %v109, 0.0
  %v239 = vsel %vm136, %v110, 0.0
  %v240 = vsel %vm136, %v111, 0.0
  %v241 = vsel %vm136, %v112, 0.0
  %v242 = vsel %vm136, %v113, 0.0
  %v243 = vsel %vm136, %v114, 0.0
  %v244 = vsel %vm136, %v115, 0.0
  %v245 = vsel %vm136, %v116, 0.0
  %v246 = vsel %vm136, %v117, 0.0
  %v247 = vsel %vm136, %v118, 0.0
  %v248 = vsel %vm136, %v119, 0.0
  %v249 = vsel %vm136, %v120, 0.0
  %v250 = vsel %vm136, %v121, 0.0
  %v251 = vsel %vm136, %v122, 0.0
  %v252 = vsel %vm136, %v123, 0.0
  %v253 = vsel %vm136, %v124, 0.0
  %v254 = vsel %vm136, %v125, 0.0
  %v255 = vsel %vm136, %v126, 0.0
  %v256 = vsel %vm136, %v127, 0.0
  %v257 = vsel %vm136, %v128, 0.0
  %v258 = vsel %vm136, %v129, 0.0
  %v259 = vsel %vm136, %v130, 0.0
  %v260 = vsel %vm136, %v131, 0.0
  %v261 = vsel %vm136, %v132, 0.0
  %v262 = vsel %vm136, %v133, 0.0
  %v263 = vsel %vm136, %v134, 0.0
  %v264 = vsel %vm136, %v135, 0.0
  %vm265 = vcmask 138240
  %266 = vst.msk [vmem:[%s1] sm:$0xff] %vm265, %v137
  %267 = vst.msk [vmem:[%s1 + $0x8] sm:$0xff] %vm265, %v138
  %vm268 = vcmask 131072
  %269 = vst.msk [vmem:[%s1 + $0x10] sm:$0x1] %vm268, 0.0
  %270 = vst.msk [vmem:[%s1 + $0x18] sm:$0xff] %vm265, %v139
  %271 = vst.msk [vmem:[%s1 + $0x20] sm:$0xff] %vm265, %v140
  %272 = vst.msk [vmem:[%s1 + $0x28] sm:$0x1] %vm268, 0.0
  %273 = vst.msk [vmem:[%s1 + $0x30] sm:$0xff] %vm265, %v141
  %274 = vst.msk [vmem:[%s1 + $0x38] sm:$0xff] %vm265, %v142
  %275 = vst.msk [vmem:[%s1 + $0x40] sm:$0x1] %vm268, 0.0
  %276 = vst.msk [vmem:[%s1 + $0x48] sm:$0xff] %vm265, %v143
  %277 = vst.msk [vmem:[%s1 + $0x50] sm:$0xff] %vm265, %v144
  %278 = vst.msk [vmem:[%s1 + $0x58] sm:$0x1] %vm268, 0.0
  %279 = vst.msk [vmem:[%s1 + $0x60] sm:$0xff] %vm265, %v145
  %280 = vst.msk [vmem:[%s1 + $0x68] sm:$0xff] %vm265, %v146
  %281 = vst.msk [vmem:[%s1 + $0x70] sm:$0x1] %vm268, 0.0
  %282 = vst.msk [vmem:[%s1 + $0x78] sm:$0xff] %vm265, %v147
  %283 = vst.msk [vmem:[%s1 + $0x80] sm:$0xff] %vm265, %v148
  %284 = vst.msk [vmem:[%s1 + $0x88] sm:$0x1] %vm268, 0.0
  %285 = vst.msk [vmem:[%s1 + $0x90] sm:$0xff] %vm265, %v149
  %286 = vst.msk [vmem:[%s1 + $0x98] sm:$0xff] %vm265, %v150
  %287 = vst.msk [vmem:[%s1 + $0xa0] sm:$0x1] %vm268, 0.0
  %288 = vst.msk [vmem:[%s1 + $0xa8] sm:$0xff] %vm265, %v151
  %289 = vst.msk [vmem:[%s1 + $0xb0] sm:$0xff] %vm265, %v152
  %290 = vst.msk [vmem:[%s1 + $0xb8] sm:$0x1] %vm268, 0.0
  %291 = vst.msk [vmem:[%s1 + $0xc0] sm:$0xff] %vm265, %v153
  %292 = vst.msk [vmem:[%s1 + $0xc8] sm:$0xff] %vm265, %v154
  %293 = vst.msk [vmem:[%s1 + $0xd0] sm:$0x1] %vm268, 0.0
  %294 = vst.msk [vmem:[%s1 + $0xd8] sm:$0xff] %vm265, %v155
  %295 = vst.msk [vmem:[%s1 + $0xe0] sm:$0xff] %vm265, %v156
  %296 = vst.msk [vmem:[%s1 + $0xe8] sm:$0x1] %vm268, 0.0
  %297 = vst.msk [vmem:[%s1 + $0xf0] sm:$0xff] %vm265, %v157
  %298 = vst.msk [vmem:[%s1 + $0xf8] sm:$0xff] %vm265, %v158
  %299 = vst.msk [vmem:[%s1 + $0x100] sm:$0x1] %vm268, 0.0
  %300 = vst.msk [vmem:[%s1 + $0x108] sm:$0xff] %vm265, %v159
  %301 = vst.msk [vmem:[%s1 + $0x110] sm:$0xff] %vm265, %v160
  %302 = vst.msk [vmem:[%s1 + $0x118] sm:$0x1] %vm268, 0.0
  %303 = vst.msk [vmem:[%s1 + $0x120] sm:$0xff] %vm265, %v161
  %304 = vst.msk [vmem:[%s1 + $0x128] sm:$0xff] %vm265, %v162
  %305 = vst.msk [vmem:[%s1 + $0x130] sm:$0x1] %vm268, 0.0
  %306 = vst.msk [vmem:[%s1 + $0x138] sm:$0xff] %vm265, %v163
  %307 = vst.msk [vmem:[%s1 + $0x140] sm:$0xff] %vm265, %v164
  %308 = vst.msk [vmem:[%s1 + $0x148] sm:$0x1] %vm268, 0.0
  %309 = vst.msk [vmem:[%s1 + $0x150] sm:$0xff] %vm265, %v165
  %310 = vst.msk [vmem:[%s1 + $0x158] sm:$0xff] %vm265, %v166
  %311 = vst.msk [vmem:[%s1 + $0x160] sm:$0x1] %vm268, 0.0
  %312 = vst.msk [vmem:[%s1 + $0x168] sm:$0xff] %vm265, %v167
  %313 = vst.msk [vmem:[%s1 + $0x170] sm:$0xff] %vm265, %v168
  %314 = vst.msk [vmem:[%s1 + $0x178] sm:$0x1] %vm268, 0.0
  %315 = vst.msk [vmem:[%s1 + $0x180] sm:$0xff] %vm265, %v169
  %316 = vst.msk [vmem:[%s1 + $0x188] sm:$0xff] %vm265, %v170
  %317 = vst.msk [vmem:[%s1 + $0x190] sm:$0x1] %vm268, 0.0
  %318 = vst.msk [vmem:[%s1 + $0x198] sm:$0xff] %vm265, %v171
  %319 = vst.msk [vmem:[%s1 + $0x1a0] sm:$0xff] %vm265, %v172
  %320 = vst.msk [vmem:[%s1 + $0x1a8] sm:$0x1] %vm268, 0.0
  %321 = vst.msk [vmem:[%s1 + $0x1b0] sm:$0xff] %vm265, %v173
  %322 = vst.msk [vmem:[%s1 + $0x1b8] sm:$0xff] %vm265, %v174
  %323 = vst.msk [vmem:[%s1 + $0x1c0] sm:$0x1] %vm268, 0.0
  %324 = vst.msk [vmem:[%s1 + $0x1c8] sm:$0xff] %vm265, %v175
  %325 = vst.msk [vmem:[%s1 + $0x1d0] sm:$0xff] %vm265, %v176
  %326 = vst.msk [vmem:[%s1 + $0x1d8] sm:$0x1] %vm268, 0.0
  %327 = vst.msk [vmem:[%s1 + $0x1e0] sm:$0xff] %vm265, %v177
  %328 = vst.msk [vmem:[%s1 + $0x1e8] sm:$0xff] %vm265, %v178
  %329 = vst.msk [vmem:[%s1 + $0x1f0] sm:$0x1] %vm268, 0.0
  %330 = vst.msk [vmem:[%s1 + $0x1f8] sm:$0xff] %vm265, %v179
  %331 = vst.msk [vmem:[%s1 + $0x200] sm:$0xff] %vm265, %v180
  %332 = vst.msk [vmem:[%s1 + $0x208] sm:$0x1] %vm268, 0.0
  %333 = vst.msk [vmem:[%s1 + $0x210] sm:$0xff] %vm265, %v181
  %334 = vst.msk [vmem:[%s1 + $0x218] sm:$0xff] %vm265, %v182
  %335 = vst.msk [vmem:[%s1 + $0x220] sm:$0x1] %vm268, 0.0
  %336 = vst.msk [vmem:[%s1 + $0x228] sm:$0xff] %vm265, %v183
  %337 = vst.msk [vmem:[%s1 + $0x230] sm:$0xff] %vm265, %v184
  %338 = vst.msk [vmem:[%s1 + $0x238] sm:$0x1] %vm268, 0.0
  %339 = vst.msk [vmem:[%s1 + $0x240] sm:$0xff] %vm265, %v185
  %340 = vst.msk [vmem:[%s1 + $0x248] sm:$0xff] %vm265, %v186
  %341 = vst.msk [vmem:[%s1 + $0x250] sm:$0x1] %vm268, 0.0
  %342 = vst.msk [vmem:[%s1 + $0x258] sm:$0xff] %vm265, %v187
  %343 = vst.msk [vmem:[%s1 + $0x260] sm:$0xff] %vm265, %v188
  %344 = vst.msk [vmem:[%s1 + $0x268] sm:$0x1] %vm268, 0.0
  %345 = vst.msk [vmem:[%s1 + $0x270] sm:$0xff] %vm265, %v189
  %346 = vst.msk [vmem:[%s1 + $0x278] sm:$0xff] %vm265, %v190
  %347 = vst.msk [vmem:[%s1 + $0x280] sm:$0x1] %vm268, 0.0
  %348 = vst.msk [vmem:[%s1 + $0x288] sm:$0xff] %vm265, %v191
  %349 = vst.msk [vmem:[%s1 + $0x290] sm:$0xff] %vm265, %v192
  %350 = vst.msk [vmem:[%s1 + $0x298] sm:$0x1] %vm268, 0.0
  %351 = vst.msk [vmem:[%s1 + $0x2a0] sm:$0xff] %vm265, %v193
  %352 = vst.msk [vmem:[%s1 + $0x2a8] sm:$0xff] %vm265, %v194
  %353 = vst.msk [vmem:[%s1 + $0x2b0] sm:$0x1] %vm268, 0.0
  %354 = vst.msk [vmem:[%s1 + $0x2b8] sm:$0xff] %vm265, %v195
  %355 = vst.msk [vmem:[%s1 + $0x2c0] sm:$0xff] %vm265, %v196
  %356 = vst.msk [vmem:[%s1 + $0x2c8] sm:$0x1] %vm268, 0.0
  %357 = vst.msk [vmem:[%s1 + $0x2d0] sm:$0xff] %vm265, %v197
  %358 = vst.msk [vmem:[%s1 + $0x2d8] sm:$0xff] %vm265, %v198
  %359 = vst.msk [vmem:[%s1 + $0x2e0] sm:$0x1] %vm268, 0.0
  %360 = vst.msk [vmem:[%s1 + $0x2e8] sm:$0xff] %vm265, %v199
  %361 = vst.msk [vmem:[%s1 + $0x2f0] sm:$0xff] %vm265, %v200
  %362 = vst.msk [vmem:[%s1 + $0x2f8] sm:$0x1] %vm268, 0.0
  %363 = vst.msk [vmem:[%s1 + $0x300] sm:$0xff] %vm265, %v201
  %364 = vst.msk [vmem:[%s1 + $0x308] sm:$0xff] %vm265, %v202
  %365 = vst.msk [vmem:[%s1 + $0x310] sm:$0x1] %vm268, 0.0
  %366 = vst.msk [vmem:[%s1 + $0x318] sm:$0xff] %vm265, %v203
  %367 = vst.msk [vmem:[%s1 + $0x320] sm:$0xff] %vm265, %v204
  %368 = vst.msk [vmem:[%s1 + $0x328] sm:$0x1] %vm268, 0.0
  %369 = vst.msk [vmem:[%s1 + $0x330] sm:$0xff] %vm265, %v205
  %370 = vst.msk [vmem:[%s1 + $0x338] sm:$0xff] %vm265, %v206
  %371 = vst.msk [vmem:[%s1 + $0x340] sm:$0x1] %vm268, 0.0
  %372 = vst.msk [vmem:[%s1 + $0x348] sm:$0xff] %vm265, %v207
  %373 = vst.msk [vmem:[%s1 + $0x350] sm:$0xff] %vm265, %v208
  %374 = vst.msk [vmem:[%s1 + $0x358] sm:$0x1] %vm268, 0.0
  %375 = vst.msk [vmem:[%s1 + $0x360] sm:$0xff] %vm265, %v209
  %376 = vst.msk [vmem:[%s1 + $0x368] sm:$0xff] %vm265, %v210
  %377 = vst.msk [vmem:[%s1 + $0x370] sm:$0x1] %vm268, 0.0
  %378 = vst.msk [vmem:[%s1 + $0x378] sm:$0xff] %vm265, %v211
  %379 = vst.msk [vmem:[%s1 + $0x380] sm:$0xff] %vm265, %v212
  %380 = vst.msk [vmem:[%s1 + $0x388] sm:$0x1] %vm268, 0.0
  %381 = vst.msk [vmem:[%s1 + $0x390] sm:$0xff] %vm265, %v213
  %382 = vst.msk [vmem:[%s1 + $0x398] sm:$0xff] %vm265, %v214
  %383 = vst.msk [vmem:[%s1 + $0x3a0] sm:$0x1] %vm268, 0.0
  %384 = vst.msk [vmem:[%s1 + $0x3a8] sm:$0xff] %vm265, %v215
  %385 = vst.msk [vmem:[%s1 + $0x3b0] sm:$0xff] %vm265, %v216
  %386 = vst.msk [vmem:[%s1 + $0x3b8] sm:$0x1] %vm268, 0.0
  %387 = vst.msk [vmem:[%s1 + $0x3c0] sm:$0xff] %vm265, %v217
  %388 = vst.msk [vmem:[%s1 + $0x3c8] sm:$0xff] %vm265, %v218
  %389 = vst.msk [vmem:[%s1 + $0x3d0] sm:$0x1] %vm268, 0.0
  %390 = vst.msk [vmem:[%s1 + $0x3d8] sm:$0xff] %vm265, %v219
  %391 = vst.msk [vmem:[%s1 + $0x3e0] sm:$0xff] %vm265, %v220
  %392 = vst.msk [vmem:[%s1 + $0x3e8] sm:$0x1] %vm268, 0.0
  %393 = vst.msk [vmem:[%s1 + $0x3f0] sm:$0xff] %vm265, %v221
  %394 = vst.msk [vmem:[%s1 + $0x3f8] sm:$0xff] %vm265, %v222
  %395 = vst.msk [vmem:[%s1 + $0x400] sm:$0x1] %vm268, 0.0
  %396 = vst.msk [vmem:[%s1 + $0x408] sm:$0xff] %vm265, %v223
  %397 = vst.msk [vmem:[%s1 + $0x410] sm:$0xff] %vm265, %v224
  %398 = vst.msk [vmem:[%s1 + $0x418] sm:$0x1] %vm268, 0.0
  %399 = vst.msk [vmem:[%s1 + $0x420] sm:$0xff] %vm265, %v225
  %400 = vst.msk [vmem:[%s1 + $0x428] sm:$0xff] %vm265, %v226
  %401 = vst.msk [vmem:[%s1 + $0x430] sm:$0x1] %vm268, 0.0
  %402 = vst.msk [vmem:[%s1 + $0x438] sm:$0xff] %vm265, %v227
  %403 = vst.msk [vmem:[%s1 + $0x440] sm:$0xff] %vm265, %v228
  %404 = vst.msk [vmem:[%s1 + $0x448] sm:$0x1] %vm268, 0.0
  %405 = vst.msk [vmem:[%s1 + $0x450] sm:$0xff] %vm265, %v229
  %406 = vst.msk [vmem:[%s1 + $0x458] sm:$0xff] %vm265, %v230
  %407 = vst.msk [vmem:[%s1 + $0x460] sm:$0x1] %vm268, 0.0
  %408 = vst.msk [vmem:[%s1 + $0x468] sm:$0xff] %vm265, %v231
  %409 = vst.msk [vmem:[%s1 + $0x470] sm:$0xff] %vm265, %v232
  %410 = vst.msk [vmem:[%s1 + $0x478] sm:$0x1] %vm268, 0.0
  %411 = vst.msk [vmem:[%s1 + $0x480] sm:$0xff] %vm265, %v233
  %412 = vst.msk [vmem:[%s1 + $0x488] sm:$0xff] %vm265, %v234
  %413 = vst.msk [vmem:[%s1 + $0x490] sm:$0x1] %vm268, 0.0
  %414 = vst.msk [vmem:[%s1 + $0x498] sm:$0xff] %vm265, %v235
  %415 = vst.msk [vmem:[%s1 + $0x4a0] sm:$0xff] %vm265, %v236
  %416 = vst.msk [vmem:[%s1 + $0x4a8] sm:$0x1] %vm268, 0.0
  %417 = vst.msk [vmem:[%s1 + $0x4b0] sm:$0xff] %vm265, %v237
  %418 = vst.msk [vmem:[%s1 + $0x4b8] sm:$0xff] %vm265, %v238
  %419 = vst.msk [vmem:[%s1 + $0x4c0] sm:$0x1] %vm268, 0.0
  %420 = vst.msk [vmem:[%s1 + $0x4c8] sm:$0xff] %vm265, %v239
  %421 = vst.msk [vmem:[%s1 + $0x4d0] sm:$0xff] %vm265, %v240
  %422 = vst.msk [vmem:[%s1 + $0x4d8] sm:$0x1] %vm268, 0.0
  %423 = vst.msk [vmem:[%s1 + $0x4e0] sm:$0xff] %vm265, %v241
  %424 = vst.msk [vmem:[%s1 + $0x4e8] sm:$0xff] %vm265, %v242
  %425 = vst.msk [vmem:[%s1 + $0x4f0] sm:$0x1] %vm268, 0.0
  %426 = vst.msk [vmem:[%s1 + $0x4f8] sm:$0xff] %vm265, %v243
  %427 = vst.msk [vmem:[%s1 + $0x500] sm:$0xff] %vm265, %v244
  %428 = vst.msk [vmem:[%s1 + $0x508] sm:$0x1] %vm268, 0.0
  %429 = vst.msk [vmem:[%s1 + $0x510] sm:$0xff] %vm265, %v245
  %430 = vst.msk [vmem:[%s1 + $0x518] sm:$0xff] %vm265, %v246
  %431 = vst.msk [vmem:[%s1 + $0x520] sm:$0x1] %vm268, 0.0
  %432 = vst.msk [vmem:[%s1 + $0x528] sm:$0xff] %vm265, %v247
  %433 = vst.msk [vmem:[%s1 + $0x530] sm:$0xff] %vm265, %v248
  %434 = vst.msk [vmem:[%s1 + $0x538] sm:$0x1] %vm268, 0.0
  %435 = vst.msk [vmem:[%s1 + $0x540] sm:$0xff] %vm265, %v249
  %436 = vst.msk [vmem:[%s1 + $0x548] sm:$0xff] %vm265, %v250
  %437 = vst.msk [vmem:[%s1 + $0x550] sm:$0x1] %vm268, 0.0
  %438 = vst.msk [vmem:[%s1 + $0x558] sm:$0xff] %vm265, %v251
  %439 = vst.msk [vmem:[%s1 + $0x560] sm:$0xff] %vm265, %v252
  %440 = vst.msk [vmem:[%s1 + $0x568] sm:$0x1] %vm268, 0.0
  %441 = vst.msk [vmem:[%s1 + $0x570] sm:$0xff] %vm265, %v253
  %442 = vst.msk [vmem:[%s1 + $0x578] sm:$0xff] %vm265, %v254
  %443 = vst.msk [vmem:[%s1 + $0x580] sm:$0x1] %vm268, 0.0
  %444 = vst.msk [vmem:[%s1 + $0x588] sm:$0xff] %vm265, %v255
  %445 = vst.msk [vmem:[%s1 + $0x590] sm:$0xff] %vm265, %v256
  %446 = vst.msk [vmem:[%s1 + $0x598] sm:$0x1] %vm268, 0.0
  %447 = vst.msk [vmem:[%s1 + $0x5a0] sm:$0xff] %vm265, %v257
  %448 = vst.msk [vmem:[%s1 + $0x5a8] sm:$0xff] %vm265, %v258
  %449 = vst.msk [vmem:[%s1 + $0x5b0] sm:$0x1] %vm268, 0.0
  %450 = vst.msk [vmem:[%s1 + $0x5b8] sm:$0xff] %vm265, %v259
  %451 = vst.msk [vmem:[%s1 + $0x5c0] sm:$0xff] %vm265, %v260
  %452 = vst.msk [vmem:[%s1 + $0x5c8] sm:$0x1] %vm268, 0.0
  %453 = vst.msk [vmem:[%s1 + $0x5d0] sm:$0xff] %vm265, %v261
  %454 = vst.msk [vmem:[%s1 + $0x5d8] sm:$0xff] %vm265, %v262
  %455 = vst.msk [vmem:[%s1 + $0x5e0] sm:$0x1] %vm268, 0.0
  %456 = vst.msk [vmem:[%s1 + $0x5e8] sm:$0xff] %vm265, %v263
  %457 = vst.msk [vmem:[%s1 + $0x5f0] sm:$0xff] %vm265, %v264
  %458 = vst.msk [vmem:[%s1 + $0x5f8] sm:$0x1] %vm268, 0.0
  // Predicated region
  $region6: #{tpu_custom_call.1} parent=0 // pred_check
    _
  $region7: #{tpu_custom_call.1} parent=0 // pred_check_branch
    %460 = sbr.rel (0) target = $region9
  $region8: #{tpu_custom_call.1} parent=0 // pred_region
    _
  $region9: #{tpu_custom_call.1} parent=0 // pred_fallthru
    _
  // Predicated region
  $region10: #{tpu_custom_call.1} parent=0 // pred_check
    _
  $region11: #{tpu_custom_call.1} parent=0 // pred_check_branch
    %462 = sbr.rel (0) target = $region13
  $region12: #{tpu_custom_call.1} parent=0 // pred_region
    _
  $region13: #{tpu_custom_call.1} parent=0 // pred_fallthru
    _

</llo_original>
